<compile_context>
chip_gen: v6e
topology: v6e:2x2x1
jax: 0.10.0
libtpu: 0.0.40
codegen_flags: <defaults>
</compile_context>

<pallas_src>
import functools

import jax
import jax.numpy as jnp
from jax.experimental import pallas as pl
from jax.experimental.pallas import tpu as pltpu


def _round_up(x: int, m: int) -> int:
    return ((x + m - 1) // m) * m


def _cdiv(a: int, b: int) -> int:
    return -(-a // b)


def _lane_pad(n: int) -> int:
    # Multiples of 256 feed full 2x256x256 MXU passes on v6e/v7x once the dim
    # is large; small dims stay at 128 to avoid blowing up padded compute
    # (v5e's MXU is 128-wide anyway).
    return _round_up(n, 256) if n > 128 else _round_up(n, 128)


def _vmem_capacity_bytes() -> int:
    try:
        return int(pltpu.get_tpu_info().vmem_capacity_bytes)
    except Exception:
        return 64 << 20  # conservative: safe on every generation (v7x = 64 MiB)


# ---------------------------------------------------------------------------
# Kernels
# ---------------------------------------------------------------------------
def mlp_kernel(x_ref, w1_ref, b1_ref, w2_ref, b2_ref, o_ref):
    """Fully-fused MLP; weights resident in VMEM, batch-tiled grid."""
    # Cast activations to bf16 on the VPU (hidden under the MXU) instead of
    # materializing a bf16 copy of x in HBM in the wrapper.
    xb = x_ref[...].astype(jnp.bfloat16)
    h = jnp.dot(xb, w1_ref[...], preferred_element_type=jnp.float32)
    h = jnp.maximum(h + b1_ref[...], 0.0)                    # f32 epilogue
    y = jnp.dot(h.astype(w2_ref.dtype), w2_ref[...],
                preferred_element_type=jnp.float32)
    o_ref[...] = (y + b2_ref[...]).astype(o_ref.dtype)


def mlp_kernel_ktiled(x_ref, w1_ref, b1_ref, w2_ref, b2_ref, o_ref, acc_ref):
    """Fallback when the weights do not fit in VMEM: the hidden dim is a
    reduction grid axis; partial products accumulate into an f32 scratch."""
    k = pl.program_id(1)

    @pl.when(k == 0)
    def _():
        acc_ref[...] = jnp.zeros_like(acc_ref)

    xb = x_ref[...].astype(jnp.bfloat16)
    h = jnp.dot(xb, w1_ref[...], preferred_element_type=jnp.float32)
    h = jnp.maximum(h + b1_ref[...], 0.0)
    acc_ref[...] += jnp.dot(h.astype(w2_ref.dtype), w2_ref[...],
                            preferred_element_type=jnp.float32)

    @pl.when(k == pl.num_programs(1) - 1)
    def _():
        o_ref[...] = (acc_ref[...] + b2_ref[...]).astype(o_ref.dtype)


# ---------------------------------------------------------------------------
# One-time parameter preparation (hoisted out of the per-call path)
# ---------------------------------------------------------------------------
def prepare_params(params):
    """Pad weights to lane-dense tiles and cast MXU operands to bf16 ONCE.
    Biases stay f32 for the epilogue.  Returns (padded_params, d_out)."""
    w1, b1, w2, b2 = params
    D, H = w1.shape
    O = w2.shape[1]
    Dp, Hp, Op = _lane_pad(D), _lane_pad(H), _lane_pad(O)
    w1p = jnp.pad(w1, ((0, Dp - D), (0, Hp - H))).astype(jnp.bfloat16)
    w2p = jnp.pad(w2, ((0, Hp - H), (0, Op - O))).astype(jnp.bfloat16)
    b1p = jnp.pad(b1.reshape(1, -1), ((0, 0), (0, Hp - H))).astype(jnp.float32)
    b2p = jnp.pad(b2.reshape(1, -1), ((0, 0), (0, Op - O))).astype(jnp.float32)
    return (w1p, b1p, w2p, b2p), int(O)


# ---------------------------------------------------------------------------
# Forward
# ---------------------------------------------------------------------------
@functools.partial(jax.jit, static_argnames=("d_out", "tile_b"))
def meta_model_forward(x, prepared, *, d_out, tile_b=512):
    """MetaModel.forward: delegate to the wrapped model (fused MLP kernel)."""
    w1p, b1p, w2p, b2p = prepared
    B, D = x.shape
    Dp, Hp = w1p.shape
    Op = w2p.shape[1]
    out_dtype = x.dtype
    x_isz = jnp.dtype(x.dtype).itemsize
    out_isz = jnp.dtype(out_dtype).itemsize

    capacity = _vmem_capacity_bytes()
    budget = int(0.80 * capacity)   # headroom for compiler internal scratch

    # Resident-path footprint: weights/biases single-buffered (Buffered(1)),
    # x tile double-buffered in its own dtype + in-kernel bf16 copy, f32 + bf16
    # hidden, f32 y, double-buffered output tile.
    weight_bytes = (Dp * Hp + Hp * Op) * 2 + (Hp + Op) * 4
    per_row = (2 * Dp * x_isz + Dp * 2
               + Hp * 4 + Hp * 2
               + Op * 4 + 2 * Op * out_isz)

    weights_resident = (weight_bytes <= int(0.6 * capacity)
                        and weight_bytes + 16 * per_row <= budget)

    if weights_resident:
        # ---- batch-tiled grid, weights fully resident -------------------
        max_tile = (budget - weight_bytes) // per_row
        max_tile = max(16, (max_tile // 16) * 16)
        tile_cap = max(16, min(tile_b, max_tile))
        num_tiles = _cdiv(B, tile_cap)
        if num_tiles == 1 and B > 128:
            num_tiles = 2               # give both TensorCores work (v7x)
        TILE_B = _round_up(_cdiv(B, num_tiles), 16)
        Bp = num_tiles * TILE_B

        xp = x if (Bp, Dp) == (B, D) else jnp.pad(x, ((0, Bp - B), (0, Dp - D)))

        footprint = weight_bytes + TILE_B * per_row
        vmem_limit = int(min(int(0.9 * capacity),
                             max(int(footprint * 1.25), 32 << 20)))
        cost = pl.CostEstimate(
            flops=2 * Bp * (Dp * Hp + Hp * Op),
            transcendentals=0,
            bytes_accessed=(xp.size * x_isz + w1p.size * 2 + w2p.size * 2
                            + b1p.size * 4 + b2p.size * 4 + Bp * Op * out_isz),
        )

        out_p = pl.pallas_call(
            mlp_kernel,
            out_shape=jax.ShapeDtypeStruct((Bp, Op), out_dtype),
            grid=(num_tiles,),
            in_specs=[
                pl.BlockSpec((TILE_B, Dp), lambda i: (i, 0)),     # x: batch-tiled
                pl.BlockSpec((Dp, Hp), lambda i: (0, 0),
                             pipeline_mode=pl.Buffered(1)),        # W1 resident
                pl.BlockSpec((1, Hp), lambda i: (0, 0),
                             pipeline_mode=pl.Buffered(1)),        # b1 resident
                pl.BlockSpec((Hp, Op), lambda i: (0, 0),
                             pipeline_mode=pl.Buffered(1)),        # W2 resident
                pl.BlockSpec((1, Op), lambda i: (0, 0),
                             pipeline_mode=pl.Buffered(1)),        # b2 resident
            ],
            out_specs=pl.BlockSpec((TILE_B, Op), lambda i: (i, 0)),
            compiler_params=pltpu.CompilerParams(
                dimension_semantics=("parallel",),
                vmem_limit_bytes=vmem_limit,
            ),
            cost_estimate=cost,
        )(xp, w1p, b1p, w2p, b2p)

    else:
        # ---- K-tiled fallback: hidden dim as a reduction grid axis -------
        tile_h = 128
        for cand in (2048, 1024, 512, 256):
            if Hp % cand != 0:
                continue
            step_w = 2 * ((Dp * cand + cand * Op) * 2 + cand * 4)
            if step_w <= budget // 2:
                tile_h = cand
                break
        num_k = Hp // tile_h

        # double-buffered W1/b1/W2 K-slices + resident b2
        step_weight_bytes = (2 * ((Dp * tile_h + tile_h * Op) * 2 + tile_h * 4)
                             + Op * 4)
        per_row_k = (2 * Dp * x_isz + Dp * 2
                     + tile_h * 4 + tile_h * 2
                     + 2 * Op * 4                      # acc scratch + partial
                     + 2 * Op * out_isz)
        max_tile = max(16, ((budget - step_weight_bytes) // per_row_k // 16) * 16)
        tile_cap = max(16, min(tile_b, max_tile))
        num_tiles = _cdiv(B, tile_cap)
        if num_tiles == 1 and B > 128:
            num_tiles = 2
        TILE_B = _round_up(_cdiv(B, num_tiles), 16)
        Bp = num_tiles * TILE_B

        xp = x if (Bp, Dp) == (B, D) else jnp.pad(x, ((0, Bp - B), (0, Dp - D)))

        footprint = step_weight_bytes + TILE_B * per_row_k
        vmem_limit = int(min(int(0.9 * capacity),
                             max(int(footprint * 1.25), 32 << 20)))
        cost = pl.CostEstimate(
            flops=2 * Bp * (Dp * Hp + Hp * Op),
            transcendentals=0,
            bytes_accessed=(xp.size * x_isz + w1p.size * 2 + w2p.size * 2
                            + b1p.size * 4 + b2p.size * 4 + Bp * Op * out_isz),
        )

        out_p = pl.pallas_call(
            mlp_kernel_ktiled,
            out_shape=jax.ShapeDtypeStruct((Bp, Op), out_dtype),
            grid=(num_tiles, num_k),
            in_specs=[
                pl.BlockSpec((TILE_B, Dp), lambda i, k: (i, 0)),   # x per batch tile
                pl.BlockSpec((Dp, tile_h), lambda i, k: (0, k)),   # W1 K-slice
                pl.BlockSpec((1, tile_h), lambda i, k: (0, k)),    # b1 K-slice
                pl.BlockSpec((tile_h, Op), lambda i, k: (k, 0)),   # W2 K-slice
                pl.BlockSpec((1, Op), lambda i, k: (0, 0),
                             pipeline_mode=pl.Buffered(1)),        # b2 resident
            ],
            out_specs=pl.BlockSpec((TILE_B, Op), lambda i, k: (i, 0)),
            scratch_shapes=[pltpu.VMEM((TILE_B, Op), jnp.float32)],
            compiler_params=pltpu.CompilerParams(
                dimension_semantics=("parallel", "arbitrary"),
                vmem_limit_bytes=vmem_limit,
            ),
            cost_estimate=cost,
        )(xp, w1p, b1p, w2p, b2p)

    # Slice away batch / output-column padding.
    return out_p[:B, :d_out]


def init_params(key, d_in, d_hidden, d_out, dtype=jnp.float32):
    """Deterministic init matching nn.Linear's default (uniform +/- 1/sqrt(fan_in))."""
    k1, k2, k3, k4 = jax.random.split(key, 4)
    lim1 = 1.0 / jnp.sqrt(jnp.array(d_in, dtype))
    lim2 = 1.0 / jnp.sqrt(jnp.array(d_hidden, dtype))
    w1 = jax.random.uniform(k1, (d_in, d_hidden), dtype, -lim1, lim1)
    b1 = jax.random.uniform(k2, (1, d_hidden), dtype, -lim1, lim1)
    w2 = jax.random.uniform(k3, (d_hidden, d_out), dtype, -lim2, lim2)
    b2 = jax.random.uniform(k4, (1, d_out), dtype, -lim2, lim2)
    return w1, b1, w2, b2


if __name__ == "__main__":
    key = jax.random.PRNGKey(0)
    kx, kp = jax.random.split(key)

    B, D, H, O = 8, 32, 64, 16
    x = jax.random.normal(kx, (B, D), jnp.float32)
    params = init_params(kp, D, H, O)

    # One-time weight prep (padding + bf16 cast hoisted out of the forward).
    prepared, d_out = prepare_params(params)

    out = meta_model_forward(x, prepared, d_out=d_out)
    out = jax.block_until_ready(out)

    # Pure-JAX reference for the same wrapped model, with matching bf16
    # MXU operands / f32 accumulation (intentional inference precision choice).
    w1, b1, w2, b2 = params
    h_ref = jnp.maximum(
        jnp.dot(x.astype(jnp.bfloat16), w1.astype(jnp.bfloat16),
                preferred_element_type=jnp.float32) + b1, 0.0)
    ref = jnp.dot(h_ref.astype(jnp.bfloat16), w2.astype(jnp.bfloat16),
                  preferred_element_type=jnp.float32) + b2

    assert out.shape == (B, O)
    assert jnp.allclose(out.astype(jnp.float32), ref, atol=1e-2, rtol=1e-2), (
        float(jnp.max(jnp.abs(out.astype(jnp.float32) - ref))))

    print("KERNEL_OK")
</pallas_src>

<mosaic_0001>
module attributes {stable_mosaic.version = 11 : i64} {
  func.func @mlp_kernel(%arg0: i32, %arg1: memref<16x128xf32, #tpu.memory_space<vmem>>, %arg2: memref<128x128xbf16, #tpu.memory_space<vmem>>, %arg3: memref<1x128xf32, #tpu.memory_space<vmem>>, %arg4: memref<128x128xbf16, #tpu.memory_space<vmem>>, %arg5: memref<1x128xf32, #tpu.memory_space<vmem>>, %arg6: memref<16x128xf32, #tpu.memory_space<vmem>>) attributes {dimension_semantics = [#tpu.dimension_semantics<parallel>], iteration_bounds = array<i64: 1>, scalar_prefetch = 0 : i64, scratch_operands = 0 : i64, tpu.core_type = #tpu.core_type<tc>, window_params = [{transform_indices = @transform_0, window_bounds = array<i64: 16, 128>}, {pipeline_mode = #tpu.pipeline_mode<synchronous>, transform_indices = @transform_1, window_bounds = array<i64: 128, 128>}, {pipeline_mode = #tpu.pipeline_mode<synchronous>, transform_indices = @transform_2, window_bounds = array<i64: 1, 128>}, {pipeline_mode = #tpu.pipeline_mode<synchronous>, transform_indices = @transform_3, window_bounds = array<i64: 128, 128>}, {pipeline_mode = #tpu.pipeline_mode<synchronous>, transform_indices = @transform_4, window_bounds = array<i64: 1, 128>}, {transform_indices = @transform_5, window_bounds = array<i64: 16, 128>}]} {
    %c0 = arith.constant 0 : index
    %c0_0 = arith.constant 0 : index
    %0 = vector.load %arg1[%c0, %c0_0] : memref<16x128xf32, #tpu.memory_space<vmem>>, vector<16x128xf32>
    %1 = arith.truncf %0 : vector<16x128xf32> to vector<16x128xbf16>
    %c0_1 = arith.constant 0 : index
    %c0_2 = arith.constant 0 : index
    %2 = vector.load %arg2[%c0_1, %c0_2] : memref<128x128xbf16, #tpu.memory_space<vmem>>, vector<128x128xbf16>
    %cst = arith.constant dense<0.000000e+00> : vector<16x128xf32>
    %3 = tpu.matmul %1, %2, %cst {dimension_numbers = #tpu.dot_dimension_numbers<[1], [0], [0], [1], [0, 0, 1, 1], [], []>} : vector<16x128xbf16>, vector<128x128xbf16>, vector<16x128xf32> -> vector<16x128xf32>
    %c0_3 = arith.constant 0 : index
    %c0_4 = arith.constant 0 : index
    %4 = vector.load %arg3[%c0_3, %c0_4] : memref<1x128xf32, #tpu.memory_space<vmem>>, vector<1x128xf32>
    %5 = vector.broadcast %4 : vector<1x128xf32> to vector<16x128xf32>
    %6 = arith.addf %3, %5 : vector<16x128xf32>
    %cst_5 = arith.constant 0.000000e+00 : f32
    %7 = vector.broadcast %cst_5 : f32 to vector<16x128xf32>
    %8 = arith.maximumf %6, %7 : vector<16x128xf32>
    %9 = arith.truncf %8 : vector<16x128xf32> to vector<16x128xbf16>
    %c0_6 = arith.constant 0 : index
    %c0_7 = arith.constant 0 : index
    %10 = vector.load %arg4[%c0_6, %c0_7] : memref<128x128xbf16, #tpu.memory_space<vmem>>, vector<128x128xbf16>
    %cst_8 = arith.constant dense<0.000000e+00> : vector<16x128xf32>
    %11 = tpu.matmul %9, %10, %cst_8 {dimension_numbers = #tpu.dot_dimension_numbers<[1], [0], [0], [1], [0, 0, 1, 1], [], []>} : vector<16x128xbf16>, vector<128x128xbf16>, vector<16x128xf32> -> vector<16x128xf32>
    %c0_9 = arith.constant 0 : index
    %c0_10 = arith.constant 0 : index
    %12 = vector.load %arg5[%c0_9, %c0_10] : memref<1x128xf32, #tpu.memory_space<vmem>>, vector<1x128xf32>
    %13 = vector.broadcast %12 : vector<1x128xf32> to vector<16x128xf32>
    %14 = arith.addf %11, %13 : vector<16x128xf32>
    %c0_11 = arith.constant 0 : index
    %c0_12 = arith.constant 0 : index
    %15 = vector.load %arg6[%c0_11, %c0_12] : memref<16x128xf32, #tpu.memory_space<vmem>>, vector<16x128xf32>
    tpu.vector_store %arg6[%c0_11, %c0_12], %14 {strides = array<i32>} : memref<16x128xf32, #tpu.memory_space<vmem>>, vector<16x128xf32>,
    return
  }
  func.func @transform_0(%arg0: i32) -> (i32, i32) {
    %c0_i32 = arith.constant 0 : i32
    %c0_i32_0 = arith.constant 0 : i32
    return %arg0, %c0_i32 : i32, i32
  }
  func.func @transform_1(%arg0: i32) -> (i32, i32) {
    %c0_i32 = arith.constant 0 : i32
    %c0_i32_0 = arith.constant 0 : i32
    %c0_i32_1 = arith.constant 0 : i32
    return %c0_i32, %c0_i32_0 : i32, i32
  }
  func.func @transform_2(%arg0: i32) -> (i32, i32) {
    %c0_i32 = arith.constant 0 : i32
    %c0_i32_0 = arith.constant 0 : i32
    %c0_i32_1 = arith.constant 0 : i32
    return %c0_i32, %c0_i32_0 : i32, i32
  }
  func.func @transform_3(%arg0: i32) -> (i32, i32) {
    %c0_i32 = arith.constant 0 : i32
    %c0_i32_0 = arith.constant 0 : i32
    %c0_i32_1 = arith.constant 0 : i32
    return %c0_i32, %c0_i32_0 : i32, i32
  }
  func.func @transform_4(%arg0: i32) -> (i32, i32) {
    %c0_i32 = arith.constant 0 : i32
    %c0_i32_0 = arith.constant 0 : i32
    %c0_i32_1 = arith.constant 0 : i32
    return %c0_i32, %c0_i32_0 : i32, i32
  }
  func.func @transform_5(%arg0: i32) -> (i32, i32) {
    %c0_i32 = arith.constant 0 : i32
    %c0_i32_0 = arith.constant 0 : i32
    return %arg0, %c0_i32 : i32, i32
  }
}

</mosaic_0001>

<llo_original>
// kernel: meta_model_forward.1
$region0: #{meta_model_forward.1}
  #allocation0 [shape = 'u32[]', space=smem, size = 0x4, offset = 0x4, fixed_abs, tag = 'smem constant byte address 0x4 - core index']
  #allocation1 [shape = 'u32[144,128]{1,0:T(1,128)}', space=vmem, size = 0x12000, scoped, tag = 'internal scratch']
  %s0 = inlined_call_operand.vmem [shape: f32[16,128], index: 0, kind: input, shape index: {}]
  %s1 = inlined_call_operand.hbm [shape: bf16[128,128], index: 1, kind: input, shape index: {}]
  %s2 = inlined_call_operand.vmem [shape: f32[1,128], index: 2, kind: input, shape index: {}]
  %s3 = inlined_call_operand.hbm [shape: bf16[128,128], index: 3, kind: input, shape index: {}]
  %s4 = inlined_call_operand.vmem [shape: f32[1,128], index: 4, kind: input, shape index: {}]
  %s5 = inlined_call_operand.vmem [shape: f32[16,128], index: 5, kind: output, shape index: {}]
  %s6 = sld [smem:[#allocation0]]
  $region38: #{meta_model_forward.1} parent=0
    _
  %s8 = ssub.s32 1, %s6
  %s9 = scalar_select 0, %s8, %s6
  $region1: #{meta_model_forward.1} parent=0
    #allocation2 [shape = 'u8[32768]{0}', space=vmem, size = 0x8000, scoped, tag = 'input window, operand 1, single buffered']
    #allocation3 [shape = 's32[1]{0}', space=sflag, size = 0x4, scoped, tag = 'scoped memory for meta_model_forward.1']
    #allocation4 [shape = 'u8[32768]{0}', space=vmem, size = 0x8000, scoped, tag = 'input window, operand 3, single buffered']
    #allocation5 [shape = 's32[1]{0}', space=sflag, size = 0x4, scoped, tag = 'scoped memory for meta_model_forward.1']
    %10 = vsyncpa [#allocation3], 0
    %11 = vsyncpa [#allocation5], 0
    // Predicated region
    $region2: #{meta_model_forward.1} parent=1 // pred_check
      _
    $region3: #{meta_model_forward.1} parent=1 // pred_check_branch
      %13 = sbr.rel (0) target = $region5
    $region4: #{meta_model_forward.1} parent=1 // pred_region
      _
    $region5: #{meta_model_forward.1} parent=1 // pred_fallthru
      _
    // Predicated region
    $region6: #{meta_model_forward.1} parent=1 // pred_check
      _
    $region7: #{meta_model_forward.1} parent=1 // pred_check_branch
      %15 = sbr.rel (0) target = $region9
    $region8: #{meta_model_forward.1} parent=1 // pred_region
      %s17 = ssub.s32 1024, 1024
      %18 = vsyncadd [#allocation3], %s17
      %s19 = sshll.u32 [#allocation2], 4
      %s20 = int_to_ptr.vmem [resolvable:$true] %s19
      %25 = dma.hbm_to_vmem [thread:$0]  %s1, 1024, %s20, [#allocation3], 64, 64, 4
    $region9: #{meta_model_forward.1} parent=1 // pred_fallthru
      _
    // Predicated region
    $region10: #{meta_model_forward.1} parent=1 // pred_check
      _
    $region11: #{meta_model_forward.1} parent=1 // pred_check_branch
      %27 = sbr.rel (0) target = $region13
    $region12: #{meta_model_forward.1} parent=1 // pred_region
      _
    $region13: #{meta_model_forward.1} parent=1 // pred_fallthru
      _
    // Predicated region
    $region14: #{meta_model_forward.1} parent=1 // pred_check
      _
    $region15: #{meta_model_forward.1} parent=1 // pred_check_branch
      %29 = sbr.rel (0) target = $region17
    $region16: #{meta_model_forward.1} parent=1 // pred_region
      %s31 = ssub.s32 1024, 1024
      %32 = vsyncadd [#allocation5], %s31
      %s33 = sshll.u32 [#allocation4], 4
      %s34 = int_to_ptr.vmem [resolvable:$true] %s33
      %39 = dma.hbm_to_vmem [thread:$0]  %s3, 1024, %s34, [#allocation5], 64, 64, 4
    $region17: #{meta_model_forward.1} parent=1 // pred_fallthru
      _
    // Predicated region
    $region18: #{meta_model_forward.1} parent=1 // pred_check
      _
    $region19: #{meta_model_forward.1} parent=1 // pred_check_branch
      %41 = sbr.rel (0) target = $region21
    $region20: #{meta_model_forward.1} parent=1 // pred_region
      _
    $region21: #{meta_model_forward.1} parent=1 // pred_fallthru
      _
    // Predicated region
    $region22: #{meta_model_forward.1} parent=1 // pred_check
      _
    $region23: #{meta_model_forward.1} parent=1 // pred_check_branch
      %43 = sbr.rel (0) target = $region25
    $region24: #{meta_model_forward.1} parent=1 // pred_region
      %44 = dma.done [#allocation3], 1024
    $region25: #{meta_model_forward.1} parent=1 // pred_fallthru
      _
    // Predicated region
    $region26: #{meta_model_forward.1} parent=1 // pred_check
      _
    $region27: #{meta_model_forward.1} parent=1 // pred_check_branch
      %46 = sbr.rel (0) target = $region29
    $region28: #{meta_model_forward.1} parent=1 // pred_region
      %47 = dma.done [#allocation5], 1024
    $region29: #{meta_model_forward.1} parent=1 // pred_fallthru
      _
    %v49 = vld [vmem:[%s0] sm:$0xff]
    %v50 = vld [vmem:[%s0 + $0x8] sm:$0xff]
    %v51 = vpack.c.bf16 %v50, %v49
    %v52 = vld [vmem:[#allocation2] sm:$0xf]
    %v53 = vld [vmem:[#allocation2 + $0x4] sm:$0xf]
    %v54 = vld [vmem:[#allocation2 + $0x8] sm:$0xf]
    %v55 = vld [vmem:[#allocation2 + $0xc] sm:$0xf]
    %v56 = vld [vmem:[#allocation2 + $0x10] sm:$0xf]
    %v57 = vld [vmem:[#allocation2 + $0x14] sm:$0xf]
    %v58 = vld [vmem:[#allocation2 + $0x18] sm:$0xf]
    %v59 = vld [vmem:[#allocation2 + $0x1c] sm:$0xf]
    %v60 = vld [vmem:[#allocation2 + $0x20] sm:$0xf]
    %v61 = vld [vmem:[#allocation2 + $0x24] sm:$0xf]
    %v62 = vld [vmem:[#allocation2 + $0x28] sm:$0xf]
    %v63 = vld [vmem:[#allocation2 + $0x2c] sm:$0xf]
    %v64 = vld [vmem:[#allocation2 + $0x30] sm:$0xf]
    %v65 = vld [vmem:[#allocation2 + $0x34] sm:$0xf]
    %v66 = vld [vmem:[#allocation2 + $0x38] sm:$0xf]
    %v67 = vld [vmem:[#allocation2 + $0x3c] sm:$0xf]
    %v68 = vld [vmem:[%s2] sm:$0x1]
    %v70 = vlaneseq
    %v71 = vshrl.u32 %v70, 7
    %v72 = vsub.s32 0, %v71
    %v73 = vrot.slane %v68, %v72
    %v91 = vunpack.c.l.b16 %v52
    %v92 = vunpack.c.l.b16 %v53
    %v93 = vunpack.c.l.b16 %v54
    %v94 = vunpack.c.l.b16 %v55
    %v95 = vunpack.c.l.b16 %v56
    %v96 = vunpack.c.l.b16 %v57
    %v97 = vunpack.c.l.b16 %v58
    %v98 = vunpack.c.l.b16 %v59
    %v99 = vunpack.c.l.b16 %v60
    %v100 = vunpack.c.l.b16 %v61
    %v101 = vunpack.c.l.b16 %v62
    %v102 = vunpack.c.l.b16 %v63
    %v103 = vunpack.c.l.b16 %v64
    %v104 = vunpack.c.l.b16 %v65
    %v105 = vunpack.c.l.b16 %v66
    %v106 = vunpack.c.l.b16 %v67
    %v107 = vpack.c.b16 %v92, %v91
    %v108 = vpack.c.b16 %v94, %v93
    %v109 = vpack.c.b16 %v96, %v95
    %v110 = vpack.c.b16 %v98, %v97
    %v111 = vpack.c.b16 %v100, %v99
    %v112 = vpack.c.b16 %v102, %v101
    %v113 = vpack.c.b16 %v104, %v103
    %v114 = vpack.c.b16 %v106, %v105
    %123 = vmatprep.subr.bf16.mxu0 0
    %124 = vmatpush1.bf16.msra.mxu0 %v114
    %125 = vmatprep.subr.bf16.mxu0 0
    %126 = vmatpush1.bf16.msra.mxu0 %v113
    %127 = vmatprep.subr.bf16.mxu0 0
    %128 = vmatpush1.bf16.msra.mxu0 %v112
    %129 = vmatprep.subr.bf16.mxu0 0
    %130 = vmatpush1.bf16.msra.mxu0 %v111
    %131 = vmatprep.subr.bf16.mxu0 0
    %132 = vmatpush1.bf16.msra.mxu0 %v110
    %133 = vmatprep.subr.bf16.mxu0 0
    %134 = vmatpush1.bf16.msra.mxu0 %v109
    %135 = vmatprep.subr.bf16.mxu0 0
    %136 = vmatpush1.bf16.msra.mxu0 %v108
    %137 = vmatprep.subr.bf16.mxu0 0
    %138 = vmatpush1.bf16.msra.mxu0 %v107
    %139 = vmatprep.subr.bf16.mxu0 0
    %140 = vmatpush2.bf16.msra.mxu0 0
    %141 = vmatprep.subr.bf16.mxu0 0
    %142 = vmatpush2.bf16.msra.mxu0 0
    %143 = vmatprep.subr.bf16.mxu0 0
    %144 = vmatpush2.bf16.msra.mxu0 0
    %145 = vmatprep.subr.bf16.mxu0 0
    %146 = vmatpush2.bf16.msra.mxu0 0
    %147 = vmatprep.subr.bf16.mxu0 0
    %148 = vmatpush2.bf16.msra.mxu0 0
    %149 = vmatprep.subr.bf16.mxu0 0
    %150 = vmatpush2.bf16.msra.mxu0 0
    %151 = vmatprep.subr.bf16.mxu0 0
    %152 = vmatpush2.bf16.msra.mxu0 0
    %153 = vmatprep.subr.bf16.mxu0 0
    %154 = vmatpush2.bf16.msra.mxu0 0
    %155 = vmatprep.mubr.bf16.mxu0 0
    %156 = vmatmul.mubr.bf16.gmra.mxu0 %v51
    %v157 = vpop.f32.mrf.mxu0
    %v158 = vadd.f32 %v73, %v157
    %v159 = vpop.f32.mrf.mxu0
    %v160 = vpop.f32.mrf.mxu0
    %v161 = vadd.f32 %v73, %v160
    %v162 = vpop.f32.mrf.mxu0
    %163 = vdwg.mxu0
    %v164 = vmax.f32 %v158, 0.0
    %v165 = vmax.f32 %v161, 0.0
    %v166 = vpack.c.bf16 %v165, %v164
    %v167 = vld [vmem:[#allocation4] sm:$0xf]
    %v168 = vld [vmem:[#allocation4 + $0x4] sm:$0xf]
    %v169 = vld [vmem:[#allocation4 + $0x8] sm:$0xf]
    %v170 = vld [vmem:[#allocation4 + $0xc] sm:$0xf]
    %v171 = vld [vmem:[#allocation4 + $0x10] sm:$0xf]
    %v172 = vld [vmem:[#allocation4 + $0x14] sm:$0xf]
    %v173 = vld [vmem:[#allocation4 + $0x18] sm:$0xf]
    %v174 = vld [vmem:[#allocation4 + $0x1c] sm:$0xf]
    %v175 = vld [vmem:[#allocation4 + $0x20] sm:$0xf]
    %v176 = vld [vmem:[#allocation4 + $0x24] sm:$0xf]
    %v177 = vld [vmem:[#allocation4 + $0x28] sm:$0xf]
    %v178 = vld [vmem:[#allocation4 + $0x2c] sm:$0xf]
    %v179 = vld [vmem:[#allocation4 + $0x30] sm:$0xf]
    %v180 = vld [vmem:[#allocation4 + $0x34] sm:$0xf]
    %v181 = vld [vmem:[#allocation4 + $0x38] sm:$0xf]
    %v182 = vld [vmem:[#allocation4 + $0x3c] sm:$0xf]
    %v183 = vld [vmem:[%s4] sm:$0x1]
    %v185 = vlaneseq
    %v186 = vshrl.u32 %v185, 7
    %v187 = vsub.s32 0, %v186
    %v188 = vrot.slane %v183, %v187
    %v206 = vunpack.c.l.b16 %v167
    %v207 = vunpack.c.l.b16 %v168
    %v208 = vunpack.c.l.b16 %v169
    %v209 = vunpack.c.l.b16 %v170
    %v210 = vunpack.c.l.b16 %v171
    %v211 = vunpack.c.l.b16 %v172
    %v212 = vunpack.c.l.b16 %v173
    %v213 = vunpack.c.l.b16 %v174
    %v214 = vunpack.c.l.b16 %v175
    %v215 = vunpack.c.l.b16 %v176
    %v216 = vunpack.c.l.b16 %v177
    %v217 = vunpack.c.l.b16 %v178
    %v218 = vunpack.c.l.b16 %v179
    %v219 = vunpack.c.l.b16 %v180
    %v220 = vunpack.c.l.b16 %v181
    %v221 = vunpack.c.l.b16 %v182
    %v222 = vpack.c.b16 %v207, %v206
    %v223 = vpack.c.b16 %v209, %v208
    %v224 = vpack.c.b16 %v211, %v210
    %v225 = vpack.c.b16 %v213, %v212
    %v226 = vpack.c.b16 %v215, %v214
    %v227 = vpack.c.b16 %v217, %v216
    %v228 = vpack.c.b16 %v219, %v218
    %v229 = vpack.c.b16 %v221, %v220
    %238 = vmatprep.subr.bf16.mxu0 0
    %239 = vmatpush1.bf16.msra.mxu0 %v229
    %240 = vmatprep.subr.bf16.mxu0 0
    %241 = vmatpush1.bf16.msra.mxu0 %v228
    %242 = vmatprep.subr.bf16.mxu0 0
    %243 = vmatpush1.bf16.msra.mxu0 %v227
    %244 = vmatprep.subr.bf16.mxu0 0
    %245 = vmatpush1.bf16.msra.mxu0 %v226
    %246 = vmatprep.subr.bf16.mxu0 0
    %247 = vmatpush1.bf16.msra.mxu0 %v225
    %248 = vmatprep.subr.bf16.mxu0 0
    %249 = vmatpush1.bf16.msra.mxu0 %v224
    %250 = vmatprep.subr.bf16.mxu0 0
    %251 = vmatpush1.bf16.msra.mxu0 %v223
    %252 = vmatprep.subr.bf16.mxu0 0
    %253 = vmatpush1.bf16.msra.mxu0 %v222
    %254 = vmatprep.subr.bf16.mxu0 0
    %255 = vmatpush2.bf16.msra.mxu0 0
    %256 = vmatprep.subr.bf16.mxu0 0
    %257 = vmatpush2.bf16.msra.mxu0 0
    %258 = vmatprep.subr.bf16.mxu0 0
    %259 = vmatpush2.bf16.msra.mxu0 0
    %260 = vmatprep.subr.bf16.mxu0 0
    %261 = vmatpush2.bf16.msra.mxu0 0
    %262 = vmatprep.subr.bf16.mxu0 0
    %263 = vmatpush2.bf16.msra.mxu0 0
    %264 = vmatprep.subr.bf16.mxu0 0
    %265 = vmatpush2.bf16.msra.mxu0 0
    %266 = vmatprep.subr.bf16.mxu0 0
    %267 = vmatpush2.bf16.msra.mxu0 0
    %268 = vmatprep.subr.bf16.mxu0 0
    %269 = vmatpush2.bf16.msra.mxu0 0
    %270 = vmatprep.mubr.bf16.mxu0 0
    %271 = vmatmul.mubr.bf16.gmra.mxu0 %v166
    %v272 = vpop.f32.mrf.mxu0
    %v273 = vadd.f32 %v188, %v272
    %v274 = vpop.f32.mrf.mxu0
    %v275 = vpop.f32.mrf.mxu0
    %v276 = vadd.f32 %v188, %v275
    %v277 = vpop.f32.mrf.mxu0
    %278 = vdwg.mxu0
    %279 = vst [vmem:[%s5] sm:$0xff] %v273
    %280 = vst [vmem:[%s5 + $0x8] sm:$0xff] %v276
    // Predicated region
    $region30: #{meta_model_forward.1} parent=1 // pred_check
      _
    $region31: #{meta_model_forward.1} parent=1 // pred_check_branch
      %282 = sbr.rel (0) target = $region33
    $region32: #{meta_model_forward.1} parent=1 // pred_region
      _
    $region33: #{meta_model_forward.1} parent=1 // pred_fallthru
      _
    // Predicated region
    $region34: #{meta_model_forward.1} parent=1 // pred_check
      _
    $region35: #{meta_model_forward.1} parent=1 // pred_check_branch
      %284 = sbr.rel (0) target = $region37
    $region36: #{meta_model_forward.1} parent=1 // pred_region
      _
    $region37: #{meta_model_forward.1} parent=1 // pred_fallthru
      _
    %285 = vsyncpa [#allocation3], 1
    %286 = vsyncpa [#allocation5], 1

</llo_original>
